<compile_context>
chip_gen: v5e
topology: v5e:2x2
jax: 0.10.0
libtpu: 0.0.40
codegen_flags: <defaults>
</compile_context>

<pallas_src>
import functools
import math

import jax
import jax.numpy as jnp
from jax import lax
from jax.experimental import pallas as pl
from jax.experimental.pallas import tpu as pltpu


def _gat_head_kernel(h1_ref, h2_ref, adj_ref, w_ref, a1_ref, a2_ref, out_ref,
                     *, use_bf16_mxu):
    h1 = h1_ref[0]          # [TQ, Din]  query-side rows of this tile
    h2 = h2_ref[0]          # [S,  Din]  full key/value side
    adj = adj_ref[0]        # [TQ, S]
    W = w_ref[...]          # [Din, Dp]  (Dp = Dout padded to a multiple of 128)
    a1 = a1_ref[...]        # [1, Dp]
    a2 = a2_ref[...]        # [1, Dp]

    if use_bf16_mxu:
        h1m = h1.astype(jnp.bfloat16)
        h2m = h2.astype(jnp.bfloat16)
        Wm = W.astype(jnp.bfloat16)
    else:
        h1m, h2m, Wm = h1, h2, W

    # Projections (lane-dense N = Dp).
    # TODO(synk): F.dropout on Wh1/Wh2 and on the attention matrix is identity
    # here (eval-mode forward).
    Wh1 = jnp.dot(h1m, Wm, preferred_element_type=jnp.float32)      # [TQ, Dp]
    Wh2 = jnp.dot(h2m, Wm, preferred_element_type=jnp.float32)      # [S,  Dp]

    # Attention logits  e[i, j] = leakyrelu( (Wh1 . a1)[i] + (Wh2 . a2)[j] ).
    # e1 is a pure VPU multiply + lane reduce ([TQ, 1] broadcasts for free).
    # e2 must land lane-oriented ([1, S]); a single one-row dot_general produces
    # it directly and avoids an [S,1] -> [1,S] cross-lane relayout.
    e1 = jnp.sum(Wh1 * a1, axis=-1, keepdims=True)                  # [TQ, 1]
    e2_row = lax.dot_general(a2, Wh2, (((1,), (1,)), ((), ())),
                             preferred_element_type=jnp.float32)    # [1, S]
    e = e1 + e2_row                                                 # [TQ, S]
    e = jnp.where(e > 0, e, 0.01 * e)                               # LeakyReLU(0.01)

    # Masked softmax over the key axis (torch: -9e15 fill, softmax dim=-1).
    att = jnp.where(adj > 0, e, jnp.float32(-9e15))
    m = jnp.max(att, axis=-1, keepdims=True)
    p = jnp.exp(att - m)
    inv_den = pl.reciprocal(jnp.sum(p, axis=-1, keepdims=True),
                            approx=use_bf16_mxu)
    att = p * inv_den

    # Aggregation matmul on the MXU.
    if use_bf16_mxu:
        out = jnp.dot(att.astype(jnp.bfloat16), Wh2.astype(jnp.bfloat16),
                      preferred_element_type=jnp.float32)
    else:
        out = jnp.dot(att, Wh2, preferred_element_type=jnp.float32)
    out_ref[0] = out.astype(out_ref.dtype)                          # [TQ, Dp]


def _choose_query_tile(s):
    """Full S for moderate lengths, else a sublane-aligned divisor so the
    attention intermediates stay O(TQ*S) in VMEM (v7x has only 64 MiB/TC)."""
    if s <= 512:
        return s
    for cand in (512, 256, 128):
        if s % cand == 0:
            return cand
    return s


def rgat_head_forward(h1, h2, adj, W, a, *, dropout=0.0, use_bf16_mxu=False,
                      query_tile=None):
    """Pallas forward pass of RGraphAttentionHead2 (eval mode)."""
    del dropout  # TODO(synk): dropout is identity in this eval-mode forward.
    B, S, d_in = h1.shape
    d_out = W.shape[1]
    assert h2.shape == (B, S, d_in)
    assert adj.shape == (B, S, S)
    assert W.shape == (d_in, d_out) and a.shape == (2 * d_out, 1)

    a1 = a[:d_out, 0][None, :]            # [1, Dout]
    a2 = a[d_out:, 0][None, :]            # [1, Dout]

    # Pad the output-feature dim to a multiple of 128 so every store (and the
    # MXU N dimension) is lane-dense; the zero pad is sliced off afterwards.
    d_pad = ((d_out + 127) // 128) * 128
    if d_pad != d_out:
        pad = d_pad - d_out
        W = jnp.pad(W, ((0, 0), (0, pad)))
        a1 = jnp.pad(a1, ((0, 0), (0, pad)))
        a2 = jnp.pad(a2, ((0, 0), (0, pad)))

    tq = query_tile if query_tile is not None else _choose_query_tile(S)
    assert S % tq == 0 and (tq == S or tq % 8 == 0)
    n_q = S // tq

    kernel = functools.partial(_gat_head_kernel, use_bf16_mxu=use_bf16_mxu)
    out = pl.pallas_call(
        kernel,
        out_shape=jax.ShapeDtypeStruct((B, S, d_pad), h1.dtype),
        grid_spec=pltpu.PrefetchScalarGridSpec(
            num_scalar_prefetch=0,
            grid=(B, n_q),
            in_specs=[
                pl.BlockSpec((1, tq, d_in), lambda b, q: (b, q, 0)),   # h1 tile
                pl.BlockSpec((1, S, d_in), lambda b, q: (b, 0, 0)),    # h2 (full S)
                pl.BlockSpec((1, tq, S), lambda b, q: (b, q, 0)),      # adj tile
                pl.BlockSpec((d_in, d_pad), lambda b, q: (0, 0)),      # W  (resident)
                pl.BlockSpec((1, d_pad), lambda b, q: (0, 0)),         # a1 (resident)
                pl.BlockSpec((1, d_pad), lambda b, q: (0, 0)),         # a2 (resident)
            ],
            out_specs=pl.BlockSpec((1, tq, d_pad), lambda b, q: (b, q, 0)),
        ),
        compiler_params=pltpu.CompilerParams(
            dimension_semantics=("parallel", "parallel")),
    )(h1, h2, adj, W, a1, a2)
    return out[..., :d_out]


# ------------------------- pure-JAX reference -------------------------------
def _ref_forward(h1, h2, adj, W, a):
    d_out = W.shape[1]
    Wh1 = h1 @ W
    Wh2 = h2 @ W
    e1 = Wh1 @ a[:d_out, :]
    e2 = Wh2 @ a[d_out:, :]
    e = e1 + jnp.swapaxes(e2, 1, 2)
    e = jnp.where(e > 0, e, 0.01 * e)
    att = jnp.where(adj > 0, e, -9e15)
    att = jax.nn.softmax(att, axis=-1)
    return att @ Wh2


# ----------------------------------------------------------------------------
if __name__ == "__main__":
    B, S = 2, 8                 # batch, number of graph nodes (seq)
    D_IN, D_OUT = 32, 16        # in_features, out_features

    key = jax.random.PRNGKey(0)
    k1, k2, ka, kw, kav = jax.random.split(key, 5)

    h1 = jax.random.normal(k1, (B, S, D_IN), jnp.float32)
    h2 = jax.random.normal(k2, (B, S, D_IN), jnp.float32)
    adj = (jax.random.uniform(ka, (B, S, S)) > 0.5).astype(jnp.float32)

    # xavier_uniform(gain=1.414) init, matching the torch __init__ shapes.
    gain = 1.414
    bw = gain * math.sqrt(6.0 / (D_IN + D_OUT))
    W = jax.random.uniform(kw, (D_IN, D_OUT), jnp.float32, -bw, bw)
    ba = gain * math.sqrt(6.0 / (2 * D_OUT + 1))
    a = jax.random.uniform(kav, (2 * D_OUT, 1), jnp.float32, -ba, ba)

    out = rgat_head_forward(h1, h2, adj, W, a, dropout=0.1)
    out = jax.block_until_ready(out)

    ref = _ref_forward(h1, h2, adj, W, a)
    assert out.shape == (B, S, D_OUT)
    assert jnp.allclose(out, ref, atol=2e-4, rtol=2e-4), "mismatch vs. JAX reference"

    # bf16-MXU fast path (perf option from review): loose numerical check only.
    out_bf16 = jax.block_until_ready(
        rgat_head_forward(h1, h2, adj, W, a, dropout=0.1, use_bf16_mxu=True))
    assert out_bf16.shape == (B, S, D_OUT)
    assert jnp.allclose(out_bf16, ref, atol=3e-1, rtol=3e-1), "bf16 fast path diverged"

    print("KERNEL_OK")
</pallas_src>

<mosaic_0001>
module attributes {stable_mosaic.version = 11 : i64} {
  func.func @_gat_head_kernel(%arg0: i32, %arg1: i32, %arg2: memref<1x8x32xf32, #tpu.memory_space<vmem>>, %arg3: memref<1x8x32xf32, #tpu.memory_space<vmem>>, %arg4: memref<1x8x8xf32, #tpu.memory_space<vmem>>, %arg5: memref<32x128xf32, #tpu.memory_space<vmem>>, %arg6: memref<1x128xf32, #tpu.memory_space<vmem>>, %arg7: memref<1x128xf32, #tpu.memory_space<vmem>>, %arg8: memref<1x8x128xf32, #tpu.memory_space<vmem>>) attributes {dimension_semantics = [#tpu.dimension_semantics<parallel>, #tpu.dimension_semantics<parallel>], iteration_bounds = array<i64: 2, 1>, scalar_prefetch = 0 : i64, scratch_operands = 0 : i64, tpu.core_type = #tpu.core_type<tc>, window_params = [{transform_indices = @transform_0, window_bounds = array<i64: 1, 8, 32>}, {transform_indices = @transform_1, window_bounds = array<i64: 1, 8, 32>}, {transform_indices = @transform_2, window_bounds = array<i64: 1, 8, 8>}, {pipeline_mode = #tpu.pipeline_mode<synchronous>, transform_indices = @transform_3, window_bounds = array<i64: 32, 128>}, {pipeline_mode = #tpu.pipeline_mode<synchronous>, transform_indices = @transform_4, window_bounds = array<i64: 1, 128>}, {pipeline_mode = #tpu.pipeline_mode<synchronous>, transform_indices = @transform_5, window_bounds = array<i64: 1, 128>}, {transform_indices = @transform_6, window_bounds = array<i64: 1, 8, 128>}]} {
    %c0 = arith.constant 0 : index
    %c0_0 = arith.constant 0 : index
    %c0_1 = arith.constant 0 : index
    %0 = vector.load %arg2[%c0, %c0_0, %c0_1] : memref<1x8x32xf32, #tpu.memory_space<vmem>>, vector<1x8x32xf32>
    %1 = vector.shape_cast %0 : vector<1x8x32xf32> to vector<8x32xf32>
    %c0_2 = arith.constant 0 : index
    %c0_3 = arith.constant 0 : index
    %c0_4 = arith.constant 0 : index
    %2 = vector.load %arg3[%c0_2, %c0_3, %c0_4] : memref<1x8x32xf32, #tpu.memory_space<vmem>>, vector<1x8x32xf32>
    %3 = vector.shape_cast %2 : vector<1x8x32xf32> to vector<8x32xf32>
    %c0_5 = arith.constant 0 : index
    %c0_6 = arith.constant 0 : index
    %c0_7 = arith.constant 0 : index
    %4 = vector.load %arg4[%c0_5, %c0_6, %c0_7] : memref<1x8x8xf32, #tpu.memory_space<vmem>>, vector<1x8x8xf32>
    %5 = vector.shape_cast %4 : vector<1x8x8xf32> to vector<8x8xf32>
    %c0_8 = arith.constant 0 : index
    %c0_9 = arith.constant 0 : index
    %6 = vector.load %arg5[%c0_8, %c0_9] : memref<32x128xf32, #tpu.memory_space<vmem>>, vector<32x128xf32>
    %c0_10 = arith.constant 0 : index
    %c0_11 = arith.constant 0 : index
    %7 = vector.load %arg6[%c0_10, %c0_11] : memref<1x128xf32, #tpu.memory_space<vmem>>, vector<1x128xf32>
    %c0_12 = arith.constant 0 : index
    %c0_13 = arith.constant 0 : index
    %8 = vector.load %arg7[%c0_12, %c0_13] : memref<1x128xf32, #tpu.memory_space<vmem>>, vector<1x128xf32>
    %cst = arith.constant dense<0.000000e+00> : vector<8x128xf32>
    %9 = tpu.matmul %1, %6, %cst {dimension_numbers = #tpu.dot_dimension_numbers<[1], [0], [0], [1], [0, 0, 1, 1], [], []>} : vector<8x32xf32>, vector<32x128xf32>, vector<8x128xf32> -> vector<8x128xf32>
    %cst_14 = arith.constant dense<0.000000e+00> : vector<8x128xf32>
    %10 = tpu.matmul %3, %6, %cst_14 {dimension_numbers = #tpu.dot_dimension_numbers<[1], [0], [0], [1], [0, 0, 1, 1], [], []>} : vector<8x32xf32>, vector<32x128xf32>, vector<8x128xf32> -> vector<8x128xf32>
    %11 = vector.broadcast %7 : vector<1x128xf32> to vector<8x128xf32>
    %12 = arith.mulf %9, %11 : vector<8x128xf32>
    %cst_15 = arith.constant dense<0.000000e+00> : vector<8xf32>
    %13 = vector.multi_reduction <add>, %12, %cst_15 [1] : vector<8x128xf32> to vector<8xf32>
    %14 = vector.shape_cast %13 : vector<8xf32> to vector<8x1xf32>
    %cst_16 = arith.constant dense<0.000000e+00> : vector<1x8xf32>
    %15 = tpu.matmul %8, %10, %cst_16 {dimension_numbers = #tpu.dot_dimension_numbers<[1], [1], [0], [0], [0, 0, 1, 0], [], []>} : vector<1x128xf32>, vector<8x128xf32>, vector<1x8xf32> -> vector<1x8xf32>
    %16 = vector.broadcast %14 : vector<8x1xf32> to vector<8x8xf32>
    %17 = vector.broadcast %15 : vector<1x8xf32> to vector<8x8xf32>
    %18 = arith.addf %16, %17 : vector<8x8xf32>
    %cst_17 = arith.constant 0.000000e+00 : f32
    %19 = vector.broadcast %cst_17 : f32 to vector<8x8xf32>
    %20 = arith.cmpf ogt, %18, %19 : vector<8x8xf32>
    %cst_18 = arith.constant 0.00999999977 : f32
    %21 = vector.broadcast %cst_18 : f32 to vector<8x8xf32>
    %22 = arith.mulf %21, %18 : vector<8x8xf32>
    %23 = arith.select %20, %18, %22 : vector<8x8xi1>, vector<8x8xf32>
    %cst_19 = arith.constant 0.000000e+00 : f32
    %24 = vector.broadcast %cst_19 : f32 to vector<8x8xf32>
    %25 = arith.cmpf ogt, %5, %24 : vector<8x8xf32>
    %cst_20 = arith.constant -9.000000e+15 : f32
    %26 = vector.broadcast %cst_20 : f32 to vector<8x8xf32>
    %27 = arith.select %25, %23, %26 : vector<8x8xi1>, vector<8x8xf32>
    %cst_21 = arith.constant dense<0xFF800000> : vector<8xf32>
    %28 = vector.multi_reduction <maximumf>, %27, %cst_21 [1] : vector<8x8xf32> to vector<8xf32>
    %29 = vector.shape_cast %28 : vector<8xf32> to vector<8x1xf32>
    %30 = vector.broadcast %29 : vector<8x1xf32> to vector<8x8xf32>
    %31 = arith.subf %27, %30 : vector<8x8xf32>
    %32 = math.exp %31 : vector<8x8xf32>
    %cst_22 = arith.constant dense<0.000000e+00> : vector<8xf32>
    %33 = vector.multi_reduction <add>, %32, %cst_22 [1] : vector<8x8xf32> to vector<8xf32>
    %34 = vector.shape_cast %33 : vector<8xf32> to vector<8x1xf32>
    %35 = tpu.reciprocal %34 : vector<8x1xf32> -> vector<8x1xf32>
    %36 = vector.broadcast %35 : vector<8x1xf32> to vector<8x8xf32>
    %37 = arith.mulf %32, %36 : vector<8x8xf32>
    %cst_23 = arith.constant dense<0.000000e+00> : vector<8x128xf32>
    %38 = tpu.matmul %37, %10, %cst_23 {dimension_numbers = #tpu.dot_dimension_numbers<[1], [0], [0], [1], [0, 0, 1, 1], [], []>} : vector<8x8xf32>, vector<8x128xf32>, vector<8x128xf32> -> vector<8x128xf32>
    %c0_24 = arith.constant 0 : index
    %c0_25 = arith.constant 0 : index
    %c0_26 = arith.constant 0 : index
    %39 = vector.load %arg8[%c0_24, %c0_25, %c0_26] : memref<1x8x128xf32, #tpu.memory_space<vmem>>, vector<1x8x128xf32>
    %40 = vector.shape_cast %39 : vector<1x8x128xf32> to vector<8x128xf32>
    %41 = vector.shape_cast %38 : vector<8x128xf32> to vector<1x8x128xf32>
    tpu.vector_store %arg8[%c0_24, %c0_25, %c0_26], %41 {strides = array<i32>} : memref<1x8x128xf32, #tpu.memory_space<vmem>>, vector<1x8x128xf32>,
    return
  }
  func.func @transform_0(%arg0: i32, %arg1: i32) -> (i32, i32, i32) {
    %c0_i32 = arith.constant 0 : i32
    %c0_i32_0 = arith.constant 0 : i32
    return %arg0, %arg1, %c0_i32 : i32, i32, i32
  }
  func.func @transform_1(%arg0: i32, %arg1: i32) -> (i32, i32, i32) {
    %c0_i32 = arith.constant 0 : i32
    %c0_i32_0 = arith.constant 0 : i32
    %c0_i32_1 = arith.constant 0 : i32
    return %arg0, %c0_i32, %c0_i32_0 : i32, i32, i32
  }
  func.func @transform_2(%arg0: i32, %arg1: i32) -> (i32, i32, i32) {
    %c0_i32 = arith.constant 0 : i32
    %c0_i32_0 = arith.constant 0 : i32
    return %arg0, %arg1, %c0_i32 : i32, i32, i32
  }
  func.func @transform_3(%arg0: i32, %arg1: i32) -> (i32, i32) {
    %c0_i32 = arith.constant 0 : i32
    %c0_i32_0 = arith.constant 0 : i32
    %c0_i32_1 = arith.constant 0 : i32
    return %c0_i32, %c0_i32_0 : i32, i32
  }
  func.func @transform_4(%arg0: i32, %arg1: i32) -> (i32, i32) {
    %c0_i32 = arith.constant 0 : i32
    %c0_i32_0 = arith.constant 0 : i32
    %c0_i32_1 = arith.constant 0 : i32
    return %c0_i32, %c0_i32_0 : i32, i32
  }
  func.func @transform_5(%arg0: i32, %arg1: i32) -> (i32, i32) {
    %c0_i32 = arith.constant 0 : i32
    %c0_i32_0 = arith.constant 0 : i32
    %c0_i32_1 = arith.constant 0 : i32
    return %c0_i32, %c0_i32_0 : i32, i32
  }
  func.func @transform_6(%arg0: i32, %arg1: i32) -> (i32, i32, i32) {
    %c0_i32 = arith.constant 0 : i32
    %c0_i32_0 = arith.constant 0 : i32
    return %arg0, %arg1, %c0_i32 : i32, i32, i32
  }
}

</mosaic_0001>

<llo_original>
// kernel: tpu_custom_call.1
$region0: #{tpu_custom_call.1}
  #allocation0 [shape = 'u32[]', space=smem, size = 0x4, offset = 0x4, fixed_abs, tag = 'smem constant byte address 0x4 - core index']
  #allocation1 [shape = 'u32[72,128]{1,0:T(1,128)}', space=vmem, size = 0x9000, scoped, tag = 'internal scratch']
  %s0 = inlined_call_operand.hbm [shape: f32[2,8,32], index: 0, kind: input, shape index: {}]
  %s1 = inlined_call_operand.hbm [shape: f32[2,8,32], index: 1, kind: input, shape index: {}]
  %s2 = inlined_call_operand.hbm [shape: f32[2,8,8], index: 2, kind: input, shape index: {}]
  %s3 = inlined_call_operand.hbm [shape: f32[32,128], index: 3, kind: input, shape index: {}]
  %s4 = inlined_call_operand.vmem [shape: f32[1,128], index: 4, kind: input, shape index: {}]
  %s5 = inlined_call_operand.vmem [shape: f32[1,128], index: 5, kind: input, shape index: {}]
  %s6 = inlined_call_operand.hbm [shape: f32[2,8,128], index: 6, kind: output, shape index: {}]
  %s7 = sld [smem:[#allocation0]]
  $region73: #{tpu_custom_call.1} parent=0
    _
  %s9 = ssub.s32 1, %s7
  %s10 = scalar_select 0, %s9, %s7
  $region1: #{tpu_custom_call.1} parent=0
    #allocation2 [shape = 'u8[8192]{0}', space=vmem, size = 0x2000, scoped, tag = 'input window, operand 0']
    #allocation3 [shape = 's32[2]{0}', space=sflag, size = 0x8, scoped, tag = 'scoped memory for tpu_custom_call.1']
    #allocation4 [shape = 's32[2]{0}', space=sflag, size = 0x8, scoped, tag = 'scoped memory for tpu_custom_call.1']
    #allocation5 [shape = 'u8[8192]{0}', space=vmem, size = 0x2000, scoped, tag = 'input window, operand 1']
    #allocation6 [shape = 's32[2]{0}', space=sflag, size = 0x8, scoped, tag = 'scoped memory for tpu_custom_call.1']
    #allocation7 [shape = 'u8[8192]{0}', space=vmem, size = 0x2000, scoped, tag = 'input window, operand 2']
    #allocation8 [shape = 'u8[16384]{0}', space=vmem, size = 0x4000, scoped, tag = 'input window, operand 3, single buffered']
    #allocation9 [shape = 's32[1]{0}', space=sflag, size = 0x4, scoped, tag = 'scoped memory for tpu_custom_call.1']
    #allocation10 [shape = 'u8[8192]{0}', space=vmem, size = 0x2000, scoped, tag = 'output window, operand 0']
    %11 = vsyncpa [#allocation3], 0
    %s12 = scalar_lea.sflag [#allocation3], 1
    %13 = vsyncpa %s12, 0
    %14 = vsyncpa [#allocation6], 0
    %s15 = scalar_lea.sflag [#allocation6], 1
    %16 = vsyncpa %s15, 0
    %17 = vsyncpa [#allocation9], 0
    %18 = vsyncpa [#allocation4], 0
    %s19 = scalar_lea.sflag [#allocation4], 1
    %20 = vsyncpa %s19, 0
    loop: start=0, step=1, limit=4
    $region2: #{tpu_custom_call.1} parent=1 // loop_pre_header
      _
    $region3: #{tpu_custom_call.1} parent=1 // loop_header
      %s22 = sphi 0, %s26
      %p23 = scmp.ge.s32.totalorder %s22, 4
      %s29 = sphi 0, %s41
      %s30 = sphi 0, %s37
      %s31 = sphi 0, %s29
      %s32 = sphi 0, %s30
      %s33 = sphi 0, %s31
      %s34 = sphi 0, %s32
      %s46 = sphi 0, %s48
      %s49 = sphi 0, %s46
      %s50 = sphi 0, %s49
      %s66 = sphi 0, %s50
      %s72 = sphi 0, %s74
      %s75 = sphi 0, %s72
      %s76 = sphi 0, %s75
      %s92 = sphi 0, %s76
      %s100 = sphi 0, %s102
      %s103 = sphi 0, %s100
      %s104 = sphi 0, %s103
      %s120 = sphi 0, %s104
      %s124 = sphi 0, %s124
      %s126 = sphi 0, %s124
      %s127 = sphi 0, %s126
      %s141 = sphi 0, %s127
      %s145 = sphi 0, %s145
      %s147 = sphi 0, %s145
      %s148 = sphi 0, %s147
      %s162 = sphi 0, %s148
      %s166 = sphi 0, %s166
      %s168 = sphi 0, %s166
      %s169 = sphi 0, %s168
      %s183 = sphi 0, %s169
      %s191 = sphi 0, %s193
      %s194 = sphi 0, %s191
      %s195 = sphi 0, %s194
      %s211 = sphi 0, %s195
    $region4: #{tpu_custom_call.1} parent=1 // loop_header_branch
      %25 = sbr.rel (%p23) target = $region8
    $region5: #{tpu_custom_call.1} parent=1 // loop_body
      %s27 = ssub.s32 %s22, 1
      %s28 = ssub.s32 %s22, 2
      %s35 = sadd.s32 1, %s30
      %p36 = scmp.ge.s32.totalorder %s35, 1
      %s37 = scalar_select %p36, 0, %s35
      %s38 = sadd.s32 1, %s29
      %s39 = scalar_select %p36, %s38, %s29
      %p40 = scmp.ge.s32.totalorder %s39, 2
      %s41 = scalar_select %p40, 0, %s39
      %s42 = ssub.s32 %s29, %s41
      %s43 = ssub.s32 %s30, %s37
      %s44 = sor.u32 %s42, %s43
      %p45 = scmp.eq.s32.totalorder %s44, 0
      %s47 = sadd.s32 %s46, 1
      %s48 = scalar_select %p45, %s46, %s47
      %p51 = pneg %p45
      %p52 = scmp.eq.s32.totalorder %s22, 1
      %p53 = por %p51, %p52
      %p54 = scmp.ne.s32.totalorder %s46, %s49
      %p55 = scmp.eq.s32.totalorder %s22, 0
      %p56 = por %p54, %p55
      %p57 = scmp.ne.s32.totalorder %s46, %s49
      %p58 = scmp.eq.s32.totalorder %s27, 1
      %p59 = por %p57, %p58
      %p60 = scmp.ne.s32.totalorder %s49, %s50
      %p61 = scmp.eq.s32.totalorder %s27, 0
      %p62 = por %p60, %p61
      %p63 = scmp.ne.s32.totalorder %s49, %s50
      %p64 = scmp.eq.s32.totalorder %s28, 1
      %p65 = por %p63, %p64
      %p67 = scmp.ne.s32.totalorder %s50, %s66
      %p68 = scmp.eq.s32.totalorder %s28, 0
      %p69 = por %p67, %p68
      %s70 = ssub.s32 %s29, %s41
      %p71 = scmp.eq.s32.totalorder %s70, 0
      %s73 = sadd.s32 %s72, 1
      %s74 = scalar_select %p71, %s72, %s73
      %p77 = pneg %p71
      %p78 = scmp.eq.s32.totalorder %s22, 1
      %p79 = por %p77, %p78
      %p80 = scmp.ne.s32.totalorder %s72, %s75
      %p81 = scmp.eq.s32.totalorder %s22, 0
      %p82 = por %p80, %p81
      %p83 = scmp.ne.s32.totalorder %s72, %s75
      %p84 = scmp.eq.s32.totalorder %s27, 1
      %p85 = por %p83, %p84
      %p86 = scmp.ne.s32.totalorder %s75, %s76
      %p87 = scmp.eq.s32.totalorder %s27, 0
      %p88 = por %p86, %p87
      %p89 = scmp.ne.s32.totalorder %s75, %s76
      %p90 = scmp.eq.s32.totalorder %s28, 1
      %p91 = por %p89, %p90
      %p93 = scmp.ne.s32.totalorder %s76, %s92
      %p94 = scmp.eq.s32.totalorder %s28, 0
      %p95 = por %p93, %p94
      %s96 = ssub.s32 %s29, %s41
      %s97 = ssub.s32 %s30, %s37
      %s98 = sor.u32 %s96, %s97
      %p99 = scmp.eq.s32.totalorder %s98, 0
      %s101 = sadd.s32 %s100, 1
      %s102 = scalar_select %p99, %s100, %s101
      %p105 = pneg %p99
      %p106 = scmp.eq.s32.totalorder %s22, 1
      %p107 = por %p105, %p106
      %p108 = scmp.ne.s32.totalorder %s100, %s103
      %p109 = scmp.eq.s32.totalorder %s22, 0
      %p110 = por %p108, %p109
      %p111 = scmp.ne.s32.totalorder %s100, %s103
      %p112 = scmp.eq.s32.totalorder %s27, 1
      %p113 = por %p111, %p112
      %p114 = scmp.ne.s32.totalorder %s103, %s104
      %p115 = scmp.eq.s32.totalorder %s27, 0
      %p116 = por %p114, %p115
      %p117 = scmp.ne.s32.totalorder %s103, %s104
      %p118 = scmp.eq.s32.totalorder %s28, 1
      %p119 = por %p117, %p118
      %p121 = scmp.ne.s32.totalorder %s104, %s120
      %p122 = scmp.eq.s32.totalorder %s28, 0
      %p123 = por %p121, %p122
      %s125 = sadd.s32 %s124, 1
      %p128 = scmp.eq.s32.totalorder %s22, 1
      %p129 = scmp.ne.s32.totalorder %s124, %s126
      %p130 = scmp.eq.s32.totalorder %s22, 0
      %p131 = por %p129, %p130
      %p132 = scmp.ne.s32.totalorder %s124, %s126
      %p133 = scmp.eq.s32.totalorder %s27, 1
      %p134 = por %p132, %p133
      %p135 = scmp.ne.s32.totalorder %s126, %s127
      %p136 = scmp.eq.s32.totalorder %s27, 0
      %p137 = por %p135, %p136
      %p138 = scmp.ne.s32.totalorder %s126, %s127
      %p139 = scmp.eq.s32.totalorder %s28, 1
      %p140 = por %p138, %p139
      %p142 = scmp.ne.s32.totalorder %s127, %s141
      %p143 = scmp.eq.s32.totalorder %s28, 0
      %p144 = por %p142, %p143
      %s146 = sadd.s32 %s145, 1
      %p149 = scmp.eq.s32.totalorder %s22, 1
      %p150 = scmp.ne.s32.totalorder %s145, %s147
      %p151 = scmp.eq.s32.totalorder %s22, 0
      %p152 = por %p150, %p151
      %p153 = scmp.ne.s32.totalorder %s145, %s147
      %p154 = scmp.eq.s32.totalorder %s27, 1
      %p155 = por %p153, %p154
      %p156 = scmp.ne.s32.totalorder %s147, %s148
      %p157 = scmp.eq.s32.totalorder %s27, 0
      %p158 = por %p156, %p157
      %p159 = scmp.ne.s32.totalorder %s147, %s148
      %p160 = scmp.eq.s32.totalorder %s28, 1
      %p161 = por %p159, %p160
      %p163 = scmp.ne.s32.totalorder %s148, %s162
      %p164 = scmp.eq.s32.totalorder %s28, 0
      %p165 = por %p163, %p164
      %s167 = sadd.s32 %s166, 1
      %p170 = scmp.eq.s32.totalorder %s22, 1
      %p171 = scmp.ne.s32.totalorder %s166, %s168
      %p172 = scmp.eq.s32.totalorder %s22, 0
      %p173 = por %p171, %p172
      %p174 = scmp.ne.s32.totalorder %s166, %s168
      %p175 = scmp.eq.s32.totalorder %s27, 1
      %p176 = por %p174, %p175
      %p177 = scmp.ne.s32.totalorder %s168, %s169
      %p178 = scmp.eq.s32.totalorder %s27, 0
      %p179 = por %p177, %p178
      %p180 = scmp.ne.s32.totalorder %s168, %s169
      %p181 = scmp.eq.s32.totalorder %s28, 1
      %p182 = por %p180, %p181
      %p184 = scmp.ne.s32.totalorder %s169, %s183
      %p185 = scmp.eq.s32.totalorder %s28, 0
      %p186 = por %p184, %p185
      %s187 = ssub.s32 %s29, %s41
      %s188 = ssub.s32 %s30, %s37
      %s189 = sor.u32 %s187, %s188
      %p190 = scmp.eq.s32.totalorder %s189, 0
      %s192 = sadd.s32 %s191, 1
      %s193 = scalar_select %p190, %s191, %s192
      %p196 = pneg %p190
      %p197 = scmp.eq.s32.totalorder %s22, 1
      %p198 = por %p196, %p197
      %p199 = scmp.ne.s32.totalorder %s191, %s194
      %p200 = scmp.eq.s32.totalorder %s22, 0
      %p201 = por %p199, %p200
      %p202 = scmp.ne.s32.totalorder %s191, %s194
      %p203 = scmp.eq.s32.totalorder %s27, 1
      %p204 = por %p202, %p203
      %p205 = scmp.ne.s32.totalorder %s194, %s195
      %p206 = scmp.eq.s32.totalorder %s27, 0
      %p207 = por %p205, %p206
      %p208 = scmp.ne.s32.totalorder %s194, %s195
      %p209 = scmp.eq.s32.totalorder %s28, 1
      %p210 = por %p208, %p209
      %p212 = scmp.ne.s32.totalorder %s195, %s211
      %p213 = scmp.eq.s32.totalorder %s28, 0
      %p214 = por %p212, %p213
      %p215 = scmp.le.s32.totalorder 1, %s22
      %p216 = scmp.lt.s32.totalorder %s22, 3
      %p217 = pnand %p215, %p216
      %p218 = pneg %p217
      // Predicated region
      $region9: #{tpu_custom_call.1} parent=5 // pred_check
        _
      $region10: #{tpu_custom_call.1} parent=5 // pred_check_branch
        %220 = sbr.rel (%p217) target = $region12
      $region11: #{tpu_custom_call.1} parent=5 // pred_region
        %s221 = ssub.s32 %s22, 1
        // Predicated region
        $region13: #{tpu_custom_call.1} parent=11 // pred_check
          %p222 = pneg %p137
        $region14: #{tpu_custom_call.1} parent=11 // pred_check_branch
          %224 = sbr.rel (%p222) target = $region16
        $region15: #{tpu_custom_call.1} parent=11 // pred_region
          %226 = vsyncadd [#allocation9], 0
          %s227 = sshll.u32 %s3, 4
          %s228 = int_to_ptr.hbm [resolvable:$true] %s227
          %s229 = sshll.u32 [#allocation8], 4
          %s230 = int_to_ptr.vmem [resolvable:$true] %s229
          %235 = dma.hbm_to_vmem [thread:$0]  %s228, 512, %s230, [#allocation9], 128, 128, 8
        $region16: #{tpu_custom_call.1} parent=11 // pred_fallthru
          _
        // Predicated region
        $region17: #{tpu_custom_call.1} parent=11 // pred_check
          %p236 = pneg %p158
        $region18: #{tpu_custom_call.1} parent=11 // pred_check_branch
          %238 = sbr.rel (%p236) target = $region20
        $region19: #{tpu_custom_call.1} parent=11 // pred_region
          _
        $region20: #{tpu_custom_call.1} parent=11 // pred_fallthru
          _
        // Predicated region
        $region21: #{tpu_custom_call.1} parent=11 // pred_check
          %p239 = pneg %p179
        $region22: #{tpu_custom_call.1} parent=11 // pred_check_branch
          %241 = sbr.rel (%p239) target = $region24
        $region23: #{tpu_custom_call.1} parent=11 // pred_region
          _
        $region24: #{tpu_custom_call.1} parent=11 // pred_fallthru
          _
      $region12: #{tpu_custom_call.1} parent=5 // pred_fallthru
        _
      %p242 = scmp.lt.s32.totalorder %s22, 2
      // Predicated region
      $region25: #{tpu_custom_call.1} parent=5 // pred_check
        %p243 = pneg %p242
      $region26: #{tpu_custom_call.1} parent=5 // pred_check_branch
        %245 = sbr.rel (%p243) target = $region28
      $region27: #{tpu_custom_call.1} parent=5 // pred_region
        // Predicated region
        $region29: #{tpu_custom_call.1} parent=27 // pred_check
          %p246 = pneg %p56
        $region30: #{tpu_custom_call.1} parent=27 // pred_check_branch
          %248 = sbr.rel (%p246) target = $region32
        $region31: #{tpu_custom_call.1} parent=27 // pred_region
          %s249 = sand.u32 %s46, 1
          %s250 = scalar_lea.sflag [#allocation3], %s249
          %s251 = sand.u32 %s46, 1
          %s252 = smul.addr %s251, 8
          %s253 = scalar_lea.vmem [#allocation2], %s252
          %255 = vsyncadd %s250, 0
          %s256 = sadd.s32 %s30, %s29
          %s257 = smul.addr %s256, 8
          %s258 = scalar_lea.hbm %s0, %s257
          %s260 = sshll.u32 %s258, 4
          %s261 = int_to_ptr.hbm [resolvable:$true] %s260
          %s262 = sshll.u32 %s253, 4
          %s263 = int_to_ptr.vmem [resolvable:$true] %s262
          %265 = dma.hbm_to_vmem [thread:$0]  %s261, 128, %s263, %s250
        $region32: #{tpu_custom_call.1} parent=27 // pred_fallthru
          _
        // Predicated region
        $region33: #{tpu_custom_call.1} parent=27 // pred_check
          %p266 = pneg %p82
        $region34: #{tpu_custom_call.1} parent=27 // pred_check_branch
          %268 = sbr.rel (%p266) target = $region36
        $region35: #{tpu_custom_call.1} parent=27 // pred_region
          %s269 = sand.u32 %s22, 1
          %s270 = scalar_lea.sflag [#allocation6], %s269
          %s271 = sand.u32 %s72, 1
          %s272 = smul.addr %s271, 8
          %s273 = scalar_lea.vmem [#allocation5], %s272
          %275 = vsyncadd %s270, 0
          %s276 = smul.addr %s29, 8
          %s277 = scalar_lea.hbm %s1, %s276
          %s279 = sshll.u32 %s277, 4
          %s280 = int_to_ptr.hbm [resolvable:$true] %s279
          %s281 = sshll.u32 %s273, 4
          %s282 = int_to_ptr.vmem [resolvable:$true] %s281
          %284 = dma.hbm_to_vmem [thread:$0]  %s280, 128, %s282, %s270
        $region36: #{tpu_custom_call.1} parent=27 // pred_fallthru
          _
        // Predicated region
        $region37: #{tpu_custom_call.1} parent=27 // pred_check
          %p285 = pneg %p110
        $region38: #{tpu_custom_call.1} parent=27 // pred_check_branch
          %287 = sbr.rel (%p285) target = $region40
        $region39: #{tpu_custom_call.1} parent=27 // pred_region
          %s288 = sand.u32 %s22, 1
          %s289 = scalar_lea.sflag [#allocation6], %s288
          %s290 = sand.u32 %s100, 1
          %s291 = smul.addr %s290, 8
          %s292 = scalar_lea.vmem [#allocation7], %s291
          %294 = vsyncadd %s289, 0
          %s295 = sadd.s32 %s30, %s29
          %s296 = smul.addr %s295, 8
          %s297 = scalar_lea.hbm %s2, %s296
          %s299 = sshll.u32 %s297, 4
          %s300 = int_to_ptr.hbm [resolvable:$true] %s299
          %s301 = sshll.u32 %s292, 4
          %s302 = int_to_ptr.vmem [resolvable:$true] %s301
          %304 = dma.hbm_to_vmem [thread:$0]  %s300, 128, %s302, %s289
        $region40: #{tpu_custom_call.1} parent=27 // pred_fallthru
          _
      $region28: #{tpu_custom_call.1} parent=5 // pred_fallthru
        _
      %p305 = scmp.le.s32.totalorder 1, %s22
      %p306 = scmp.lt.s32.totalorder %s22, 3
      %p307 = pnand %p305, %p306
      %p308 = pneg %p307
      // Predicated region
      $region41: #{tpu_custom_call.1} parent=5 // pred_check
        _
      $region42: #{tpu_custom_call.1} parent=5 // pred_check_branch
        %310 = sbr.rel (%p307) target = $region44
      $region43: #{tpu_custom_call.1} parent=5 // pred_region
        %s311 = ssub.s32 %s22, 1
        %s312 = sand.u32 %s49, 1
        %s313 = scalar_lea.sflag [#allocation3], %s312
        %s314 = sand.u32 %s49, 1
        %s315 = smul.addr %s314, 8
        %s316 = scalar_lea.vmem [#allocation2], %s315
        // Predicated region
        $region45: #{tpu_custom_call.1} parent=43 // pred_check
          %p317 = pneg %p62
        $region46: #{tpu_custom_call.1} parent=43 // pred_check_branch
          %319 = sbr.rel (%p317) target = $region48
        $region47: #{tpu_custom_call.1} parent=43 // pred_region
          %321 = dma.done %s313, 128
        $region48: #{tpu_custom_call.1} parent=43 // pred_fallthru
          _
        %s322 = sand.u32 %s27, 1
        %s323 = scalar_lea.sflag [#allocation6], %s322
        %s324 = sand.u32 %s75, 1
        %s325 = smul.addr %s324, 8
        %s326 = scalar_lea.vmem [#allocation5], %s325
        // Predicated region
        $region49: #{tpu_custom_call.1} parent=43 // pred_check
          %p327 = pneg %p88
        $region50: #{tpu_custom_call.1} parent=43 // pred_check_branch
          %329 = sbr.rel (%p327) target = $region52
        $region51: #{tpu_custom_call.1} parent=43 // pred_region
          %331 = dma.done %s323, 128
        $region52: #{tpu_custom_call.1} parent=43 // pred_fallthru
          _
        %s332 = sand.u32 %s27, 1
        %s333 = scalar_lea.sflag [#allocation6], %s332
        %s334 = sand.u32 %s103, 1
        %s335 = smul.addr %s334, 8
        %s336 = scalar_lea.vmem [#allocation7], %s335
        // Predicated region
        $region53: #{tpu_custom_call.1} parent=43 // pred_check
          %p337 = pneg %p116
        $region54: #{tpu_custom_call.1} parent=43 // pred_check_branch
          %339 = sbr.rel (%p337) target = $region56
        $region55: #{tpu_custom_call.1} parent=43 // pred_region
          %341 = dma.done %s333, 128
        $region56: #{tpu_custom_call.1} parent=43 // pred_fallthru
          _
        // Predicated region
        $region57: #{tpu_custom_call.1} parent=43 // pred_check
          %p342 = pneg %p137
        $region58: #{tpu_custom_call.1} parent=43 // pred_check_branch
          %344 = sbr.rel (%p342) target = $region60
        $region59: #{tpu_custom_call.1} parent=43 // pred_region
          %346 = dma.done [#allocation9], 512
        $region60: #{tpu_custom_call.1} parent=43 // pred_fallthru
          _
        %s347 = sand.u32 %s49, 1
        %s348 = scalar_lea.sflag [#allocation3], %s347
        %s349 = sand.u32 %s49, 1
        %s350 = smul.addr %s349, 8
        %s351 = scalar_lea.vmem [#allocation2], %s350
        %p352 = pneg %p62
        %p353 = pneg %p59
        %s354 = sand.u32 %s27, 1
        %s355 = scalar_lea.sflag [#allocation6], %s354
        %s356 = sand.u32 %s75, 1
        %s357 = smul.addr %s356, 8
        %s358 = scalar_lea.vmem [#allocation5], %s357
        %p359 = pneg %p88
        %p360 = pneg %p85
        %s361 = sand.u32 %s27, 1
        %s362 = scalar_lea.sflag [#allocation6], %s361
        %s363 = sand.u32 %s103, 1
        %s364 = smul.addr %s363, 8
        %s365 = scalar_lea.vmem [#allocation7], %s364
        %p366 = pneg %p116
        %p367 = pneg %p113
        %p368 = pneg %p137
        %p369 = pneg %p134
        %p370 = pneg %p158
        %p371 = pneg %p155
        %p372 = pneg %p179
        %p373 = pneg %p176
        %p374 = pneg %p207
        %p375 = pneg %p204
        %s376 = sand.u32 %s194, 1
        %s377 = scalar_lea.sflag [#allocation4], %s376
        %s378 = sand.u32 %s194, 1
        %s379 = smul.addr %s378, 8
        %s380 = scalar_lea.vmem [#allocation10], %s379
        %v381 = vld [vmem:[%s316] sm:$0xff]
        %v382 = vld [vmem:[%s326] sm:$0xff]
        %v383 = vld [vmem:[%s336] sm:$0xff]
        %v384 = vld [vmem:[#allocation8] sm:$0xff]
        %v385 = vld [vmem:[#allocation8 + $0x8] sm:$0xff]
        %v386 = vld [vmem:[#allocation8 + $0x10] sm:$0xff]
        %v387 = vld [vmem:[#allocation8 + $0x18] sm:$0xff]
        %v388 = vld [vmem:[%s4] sm:$0x1]
        %v389 = vld [vmem:[%s5] sm:$0x1]
        %vm390 = vcmask 261120
        %v392 = vsel %vm390, %v381, 0
        %394 = vmatpush.msra.mxu0 0.0
        %395 = vmatpush.msra.mxu0 0.0
        %396 = vmatpush.msra.mxu0 0.0
        %397 = vmatpush.msra.mxu0 0.0
        %398 = vmatpush.msra.mxu0 0.0
        %399 = vmatpush.msra.mxu0 0.0
        %400 = vmatpush.msra.mxu0 0.0
        %401 = vmatpush.msra.mxu0 0.0
        %402 = vmatpush.msra.mxu0 0.0
        %403 = vmatpush.msra.mxu0 0.0
        %404 = vmatpush.msra.mxu0 0.0
        %405 = vmatpush.msra.mxu0 0.0
        %406 = vmatpush.msra.mxu0 %v387
        %407 = vmatpush.msra.mxu0 %v386
        %408 = vmatpush.msra.mxu0 %v385
        %409 = vmatpush.msra.mxu0 %v384
        %410 = vmatmul.f32.gmra.mxu0 %v392
        %v411 = vpop.f32.mrf.mxu0
        %v412 = vadd.f32 0.0, %v411
        %413 = vdwg.mxu0
        %v415 = vsel %vm390, %v382, 0
        %417 = vmatpush.msra.mxu0 0.0
        %418 = vmatpush.msra.mxu0 0.0
        %419 = vmatpush.msra.mxu0 0.0
        %420 = vmatpush.msra.mxu0 0.0
        %421 = vmatpush.msra.mxu0 0.0
        %422 = vmatpush.msra.mxu0 0.0
        %423 = vmatpush.msra.mxu0 0.0
        %424 = vmatpush.msra.mxu0 0.0
        %425 = vmatpush.msra.mxu0 0.0
        %426 = vmatpush.msra.mxu0 0.0
        %427 = vmatpush.msra.mxu0 0.0
        %428 = vmatpush.msra.mxu0 0.0
        %429 = vmatpush.msra.mxu0 %v387
        %430 = vmatpush.msra.mxu0 %v386
        %431 = vmatpush.msra.mxu0 %v385
        %432 = vmatpush.msra.mxu0 %v384
        %433 = vmatmul.f32.gmra.mxu0 %v415
        %v434 = vpop.f32.mrf.mxu0
        %v435 = vadd.f32 0.0, %v434
        %436 = vdwg.mxu0
        %v438 = vperm.slane %v388, 0
        %v440 = vmul.f32 %v412, %v438
        %441 = vadd.xlane.f32.xlu0 %v440
        %v442 = vpop.xlane.xlu0 %441
        %443 = vmatpush.xpose.msra.mxu0 0.0
        %444 = vmatpush.xpose.msra.mxu0 0.0
        %445 = vmatpush.xpose.msra.mxu0 0.0
        %446 = vmatpush.xpose.msra.mxu0 0.0
        %447 = vmatpush.xpose.msra.mxu0 0.0
        %448 = vmatpush.xpose.msra.mxu0 0.0
        %449 = vmatpush.xpose.msra.mxu0 0.0
        %450 = vmatpush.xpose.msra.mxu0 0.0
        %451 = vmatpush.xpose.msra.mxu0 0.0
        %452 = vmatpush.xpose.msra.mxu0 0.0
        %453 = vmatpush.xpose.msra.mxu0 0.0
        %454 = vmatpush.xpose.msra.mxu0 0.0
        %455 = vmatpush.xpose.msra.mxu0 0.0
        %456 = vmatpush.xpose.msra.mxu0 0.0
        %457 = vmatpush.xpose.msra.mxu0 0.0
        %458 = vmatpush.xpose.msra.mxu0 %v435
        %459 = vmatmul.f32.gmra.mxu0 %v389
        %v460 = vpop.f32.mrf.mxu0
        %v461 = vadd.f32 0.0, %v460
        %462 = vdwg.mxu0
        %v463 = vperm.slane %v461, 0
        %v464 = vadd.f32 %v442, %v463
        %vm465 = vcmp.gt.f32.partialorder %v464, 0.0
        %v466 = vmul.f32 %v464, 0.01
        %v467 = vsel %vm465, %v464, %v466
        %vm468 = vcmp.gt.f32.partialorder %v383, 0.0
        %v469 = vsel %vm468, %v467, -9e+15
        %vm470 = vcmask 64512
        %v471 = vsel %vm470, %v469, -inf
        %472 = vmax.xlane.f32.xlu0 %v471
        %v473 = vpop.xlane.xlu0 %472
        %v474 = vsub.f32 %v469, %v473
        %v475 = vmul.f32 %v474, 1.442695
        %v476 = vpow.pop %v475
        %v477 = vsel %vm470, %v476, 0.0
        %478 = vadd.xlane.f32.xlu0 %v477
        %v479 = vpop.xlane.xlu0 %478
        %v480 = vrcp.pop %v479
        %v481 = vmul.f32 %v479, %v480
        %v482 = vsub.f32 1.0, %v481
        %v483 = vmul.f32 %v480, %v482
        %v484 = vadd.f32 %v480, %v483
        %vm485 = vweird.f32 %v479
        %vm486 = vweird.f32 %v480
        %vm487 = vmor %vm485, %vm486
        %v488 = vsel %vm487, %v480, %v484
        %v489 = vand.u32 2147483647, %v479
        %vm490 = vcmp.eq.f32.partialorder %v489, 8.507059e+37
        %v491 = vand.u32 %v479, 2147483648
        %v492 = vor.u32 1.1754944e-38, %v491
        %v493 = vsel %vm490, %v492, %v488
        %v494 = vmul.f32 %v476, %v493
        %v496 = vsel %vm470, %v494, 0
        %498 = vmatpush.msra.mxu0 0.0
        %499 = vmatpush.msra.mxu0 0.0
        %500 = vmatpush.msra.mxu0 0.0
        %501 = vmatpush.msra.mxu0 0.0
        %502 = vmatpush.msra.mxu0 0.0
        %503 = vmatpush.msra.mxu0 0.0
        %504 = vmatpush.msra.mxu0 0.0
        %505 = vmatpush.msra.mxu0 0.0
        %506 = vmatpush.msra.mxu0 0.0
        %507 = vmatpush.msra.mxu0 0.0
        %508 = vmatpush.msra.mxu0 0.0
        %509 = vmatpush.msra.mxu0 0.0
        %510 = vmatpush.msra.mxu0 0.0
        %511 = vmatpush.msra.mxu0 0.0
        %512 = vmatpush.msra.mxu0 0.0
        %513 = vmatpush.msra.mxu0 %v435
        %514 = vmatmul.f32.gmra.mxu0 %v496
        %v515 = vpop.f32.mrf.mxu0
        %v516 = vadd.f32 0.0, %v515
        %517 = vdwg.mxu0
        %518 = vst [vmem:[%s380] sm:$0xff] %v516
        %s519 = sand.u32 %s194, 1
        %s520 = scalar_lea.sflag [#allocation4], %s519
        %s521 = sand.u32 %s194, 1
        %s522 = smul.addr %s521, 8
        %s523 = scalar_lea.vmem [#allocation10], %s522
        // Predicated region
        $region61: #{tpu_custom_call.1} parent=43 // pred_check
          %p524 = pneg %p204
        $region62: #{tpu_custom_call.1} parent=43 // pred_check_branch
          %526 = sbr.rel (%p524) target = $region64
        $region63: #{tpu_custom_call.1} parent=43 // pred_region
          %528 = vsyncadd %s520, 0
          %s529 = sadd.s32 %s32, %s31
          %s530 = smul.addr %s529, 8
          %s531 = scalar_lea.hbm %s6, %s530
          %s533 = sshll.u32 %s523, 4
          %s534 = int_to_ptr.vmem [resolvable:$true] %s533
          %s535 = sshll.u32 %s531, 4
          %s536 = int_to_ptr.hbm [resolvable:$true] %s535
          %538 = dma.vmem_to_hbm [thread:$0]  %s534, 128, %s536, %s520
        $region64: #{tpu_custom_call.1} parent=43 // pred_fallthru
          _
      $region44: #{tpu_custom_call.1} parent=5 // pred_fallthru
        _
      %p539 = scmp.le.s32.totalorder 2, %s22
      // Predicated region
      $region65: #{tpu_custom_call.1} parent=5 // pred_check
        %p540 = pneg %p539
      $region66: #{tpu_custom_call.1} parent=5 // pred_check_branch
        %542 = sbr.rel (%p540) target = $region68
      $region67: #{tpu_custom_call.1} parent=5 // pred_region
        %s543 = ssub.s32 %s22, 2
        // Predicated region
        $region69: #{tpu_custom_call.1} parent=67 // pred_check
          %p544 = pneg %p210
        $region70: #{tpu_custom_call.1} parent=67 // pred_check_branch
          %546 = sbr.rel (%p544) target = $region72
        $region71: #{tpu_custom_call.1} parent=67 // pred_region
          %s547 = sand.u32 %s195, 1
          %s548 = scalar_lea.sflag [#allocation4], %s547
          %s549 = sand.u32 %s195, 1
          %s550 = smul.addr %s549, 8
          %s551 = scalar_lea.vmem [#allocation10], %s550
          %553 = dma.done %s548, 128
        $region72: #{tpu_custom_call.1} parent=67 // pred_fallthru
          _
      $region68: #{tpu_custom_call.1} parent=5 // pred_fallthru
        _
    $region6: #{tpu_custom_call.1} parent=1 // loop_footer
      %s26 = sadd.s32 1, %s22
    $region7: #{tpu_custom_call.1} parent=1 // loop_footer_branch
      %21 = sbr.rel target = $region3
    $region8: #{tpu_custom_call.1} parent=1 // loop_exit
      _
    %554 = vsyncpa [#allocation3], 1
    %s555 = scalar_lea.sflag [#allocation3], 1
    %556 = vsyncpa %s555, 1
    %557 = vsyncpa [#allocation6], 1
    %s558 = scalar_lea.sflag [#allocation6], 1
    %559 = vsyncpa %s558, 1
    %560 = vsyncpa [#allocation9], 1
    %561 = vsyncpa [#allocation4], 1
    %s562 = scalar_lea.sflag [#allocation4], 1
    %563 = vsyncpa %s562, 1

</llo_original>
